<compile_context>
chip_gen: v6e
topology: v6e:2x2x1
jax: 0.10.0
libtpu: 0.0.40
codegen_flags: <defaults>
</compile_context>

<pallas_src>
import functools

import jax
import jax.numpy as jnp
from jax.experimental import pallas as pl
from jax.experimental.pallas import tpu as pltpu


def _round_up(x, m):
    return -(-x // m) * m


def _cwd_kernel(t_ref, s_ref, out_ref, acc_ref, *, inv_tau):
    """Accumulate sum over rows of KL(p_teacher || p_student) for this stage.

    t_ref, s_ref: (TR, HW) tiles of teacher / student rows.
    out_ref:      (1, 1) per-core partial sum (written once, at the end).
    acc_ref:      (1, 1) VMEM scratch accumulator (resident across the grid).
    """
    i = pl.program_id(1)

    @pl.when(i == 0)
    def _():
        acc_ref[...] = jnp.zeros_like(acc_ref)

    t = t_ref[...].astype(jnp.float32)
    s = s_ref[...].astype(jnp.float32)
    if inv_tau != 1.0:
        t = t * inv_tau
        s = s * inv_tau

    # Row-wise numerically-stable softmax statistics.
    t_shift = t - jnp.max(t, axis=-1, keepdims=True)
    s_shift = s - jnp.max(s, axis=-1, keepdims=True)
    t_exp = jnp.exp(t_shift)
    t_sum = jnp.sum(t_exp, axis=-1, keepdims=True)
    s_sum = jnp.sum(jnp.exp(s_shift), axis=-1, keepdims=True)

    # sum_j p_t*(log p_t - log p_s)
    #   = sum_j t_exp*(t_shift - s_shift) / t_sum + (log s_sum - log t_sum)
    num = jnp.sum(t_exp * (t_shift - s_shift), axis=-1, keepdims=True)
    row_cost = num / t_sum + (jnp.log(s_sum) - jnp.log(t_sum))

    acc_ref[...] += jnp.sum(row_cost)

    @pl.when(i == pl.num_programs(1) - 1)
    def _():
        out_ref[...] = acc_ref[...]


def cwd_stage_loss(y_s, y_t, tau=1.0):
    """One stage of CWDLoss: KL(teacher || student) over flattened spatial dims."""
    assert y_s.shape == y_t.shape
    N, C, H, W = y_s.shape
    rows, hw = N * C, H * W

    s2 = y_s.reshape(rows, hw)
    t2 = y_t.reshape(rows, hw)

    itemsize = s2.dtype.itemsize
    sub = 16 if s2.dtype == jnp.bfloat16 else 8  # sublane packing multiple

    # Row-tile size: largest multiple of `sub` with one input buffer <= ~4 MiB
    # (2 inputs x 2 pipeline buffers -> ~16 MiB total), capped at 1024 rows.
    tile_budget = 4 * 1024 * 1024
    tr_cap = max(sub, (tile_budget // max(1, hw * itemsize)) // sub * sub)
    tr_cap = min(tr_cap, 1024)
    TR = min(tr_cap, _round_up(rows, sub))

    rows_pad = _round_up(rows, TR)
    if rows_pad != rows:
        # Zero-padded rows are numerically neutral: teacher and student padded
        # rows are identical uniform softmaxes, so their KL contribution is 0.
        pad = rows_pad - rows
        s2 = jnp.pad(s2, ((0, pad), (0, 0)))
        t2 = jnp.pad(t2, ((0, pad), (0, 0)))

    n_tiles = rows_pad // TR
    # Split row tiles across TensorCores (2x on v7x megacore; a plain serial
    # outer loop on single-core v5e/v6e).
    n_cores = 2 if (n_tiles >= 2 and n_tiles % 2 == 0) else 1
    tiles_per_core = n_tiles // n_cores

    partials = pl.pallas_call(
        functools.partial(_cwd_kernel, inv_tau=1.0 / float(tau)),
        out_shape=jax.ShapeDtypeStruct((n_cores, 1), jnp.float32),
        grid_spec=pltpu.PrefetchScalarGridSpec(
            num_scalar_prefetch=0,
            grid=(n_cores, tiles_per_core),
            in_specs=[
                pl.BlockSpec((TR, hw), lambda c, i: (c * tiles_per_core + i, 0)),
                pl.BlockSpec((TR, hw), lambda c, i: (c * tiles_per_core + i, 0)),
            ],
            out_specs=pl.BlockSpec((1, 1), lambda c, i: (c, 0)),
            scratch_shapes=[pltpu.VMEM((1, 1), jnp.float32)],
        ),
        compiler_params=pltpu.CompilerParams(
            dimension_semantics=("parallel", "arbitrary"),
            vmem_limit_bytes=48 * 1024 * 1024,
        ),
    )(t2, s2)

    return jnp.sum(partials) * (tau ** 2) / (C * N)


def cwd_loss(y_s_list, y_t_list, tau=1.0):
    """Full CWDLoss.forward: sum of per-stage losses."""
    assert len(y_s_list) == len(y_t_list)
    total = jnp.float32(0.0)
    for s, t in zip(y_s_list, y_t_list):
        total = total + cwd_stage_loss(s, t, tau=tau)
    return total


def _reference_cwd_loss(y_s_list, y_t_list, tau=1.0):
    """Pure-JAX reference (mirrors the PyTorch code) for sanity checking."""
    total = jnp.float32(0.0)
    for s, t in zip(y_s_list, y_t_list):
        N, C, H, W = s.shape
        s2 = s.reshape(-1, H * W).astype(jnp.float32) / tau
        t2 = t.reshape(-1, H * W).astype(jnp.float32) / tau
        p_t = jax.nn.softmax(t2, axis=1)
        cost = jnp.sum(
            p_t * jax.nn.log_softmax(t2, axis=1)
            - p_t * jax.nn.log_softmax(s2, axis=1)
        ) * tau ** 2
        total = total + cost / (C * N)
    return total


if __name__ == "__main__":
    key = jax.random.PRNGKey(0)
    k1, k2, k3, k4, k5, k6 = jax.random.split(key, 6)

    # three "stages" of student / teacher feature maps, NCHW
    # (third stage has rows = N*C = 3, exercising the zero-padding path)
    y_s = [
        jax.random.normal(k1, (2, 4, 16, 16), dtype=jnp.float32),
        jax.random.normal(k2, (2, 8, 8, 8), dtype=jnp.float32),
        jax.random.normal(k5, (1, 3, 8, 8), dtype=jnp.float32),
    ]
    y_t = [
        jax.random.normal(k3, (2, 4, 16, 16), dtype=jnp.float32),
        jax.random.normal(k4, (2, 8, 8, 8), dtype=jnp.float32),
        jax.random.normal(k6, (1, 3, 8, 8), dtype=jnp.float32),
    ]

    loss = cwd_loss(y_s, y_t, tau=1.0)
    loss = jax.block_until_ready(loss)

    ref = jax.block_until_ready(_reference_cwd_loss(y_s, y_t, tau=1.0))
    assert jnp.allclose(loss, ref, rtol=1e-4, atol=1e-5), (loss, ref)

    print("KERNEL_OK")
</pallas_src>

<mosaic_0001>
module attributes {stable_mosaic.version = 11 : i64} {
  func.func @_cwd_kernel(%arg0: i32, %arg1: i32, %arg2: memref<8x256xf32, #tpu.memory_space<vmem>>, %arg3: memref<8x256xf32, #tpu.memory_space<vmem>>, %arg4: memref<1x1xf32, #tpu.memory_space<vmem>>, %arg5: memref<1x1xf32, #tpu.memory_space<vmem>>) attributes {dimension_semantics = [#tpu.dimension_semantics<parallel>, #tpu.dimension_semantics<arbitrary>], iteration_bounds = array<i64: 1, 1>, scalar_prefetch = 0 : i64, scratch_operands = 1 : i64, tpu.core_type = #tpu.core_type<tc>, window_params = [{transform_indices = @transform_0, window_bounds = array<i64: 8, 256>}, {transform_indices = @transform_1, window_bounds = array<i64: 8, 256>}, {transform_indices = @transform_2, window_bounds = array<i64: 1, 1>}]} {
    %c0_i32 = arith.constant 0 : i32
    %0 = arith.cmpi eq, %arg1, %c0_i32 : i32
    %1 = arith.extui %0 : i1 to i32
    %c0_i32_0 = arith.constant 0 : i32
    %2 = arith.cmpi ne, %1, %c0_i32_0 : i32
    scf.if %2 {
      %cst_15 = arith.constant 0.000000e+00 : f32
      %39 = vector.broadcast %cst_15 : f32 to vector<1x1xf32>
      %c0_16 = arith.constant 0 : index
      %c0_17 = arith.constant 0 : index
      %40 = vector.load %arg5[%c0_16, %c0_17] : memref<1x1xf32, #tpu.memory_space<vmem>>, vector<1x1xf32>
      tpu.vector_store %arg5[%c0_16, %c0_17], %39 {strides = array<i32>} : memref<1x1xf32, #tpu.memory_space<vmem>>, vector<1x1xf32>,
    } else {
    }
    %c0 = arith.constant 0 : index
    %c0_1 = arith.constant 0 : index
    %3 = vector.load %arg2[%c0, %c0_1] : memref<8x256xf32, #tpu.memory_space<vmem>>, vector<8x256xf32>
    %c0_2 = arith.constant 0 : index
    %c0_3 = arith.constant 0 : index
    %4 = vector.load %arg3[%c0_2, %c0_3] : memref<8x256xf32, #tpu.memory_space<vmem>>, vector<8x256xf32>
    %cst = arith.constant dense<0xFF800000> : vector<8xf32>
    %5 = vector.multi_reduction <maximumf>, %3, %cst [1] : vector<8x256xf32> to vector<8xf32>
    %6 = vector.shape_cast %5 : vector<8xf32> to vector<8x1xf32>
    %7 = vector.broadcast %6 : vector<8x1xf32> to vector<8x256xf32>
    %8 = arith.subf %3, %7 : vector<8x256xf32>
    %cst_4 = arith.constant dense<0xFF800000> : vector<8xf32>
    %9 = vector.multi_reduction <maximumf>, %4, %cst_4 [1] : vector<8x256xf32> to vector<8xf32>
    %10 = vector.shape_cast %9 : vector<8xf32> to vector<8x1xf32>
    %11 = vector.broadcast %10 : vector<8x1xf32> to vector<8x256xf32>
    %12 = arith.subf %4, %11 : vector<8x256xf32>
    %13 = math.exp %8 : vector<8x256xf32>
    %cst_5 = arith.constant dense<0.000000e+00> : vector<8xf32>
    %14 = vector.multi_reduction <add>, %13, %cst_5 [1] : vector<8x256xf32> to vector<8xf32>
    %15 = vector.shape_cast %14 : vector<8xf32> to vector<8x1xf32>
    %16 = math.exp %12 : vector<8x256xf32>
    %cst_6 = arith.constant dense<0.000000e+00> : vector<8xf32>
    %17 = vector.multi_reduction <add>, %16, %cst_6 [1] : vector<8x256xf32> to vector<8xf32>
    %18 = vector.shape_cast %17 : vector<8xf32> to vector<8x1xf32>
    %19 = arith.subf %8, %12 : vector<8x256xf32>
    %20 = arith.mulf %13, %19 : vector<8x256xf32>
    %cst_7 = arith.constant dense<0.000000e+00> : vector<8xf32>
    %21 = vector.multi_reduction <add>, %20, %cst_7 [1] : vector<8x256xf32> to vector<8xf32>
    %22 = vector.shape_cast %21 : vector<8xf32> to vector<8x1xf32>
    %23 = arith.divf %22, %15 : vector<8x1xf32>
    %24 = math.log %18 : vector<8x1xf32>
    %25 = math.log %15 : vector<8x1xf32>
    %26 = arith.subf %24, %25 : vector<8x1xf32>
    %27 = arith.addf %23, %26 : vector<8x1xf32>
    %c0_8 = arith.constant 0 : index
    %c0_9 = arith.constant 0 : index
    %28 = vector.load %arg5[%c0_8, %c0_9] : memref<1x1xf32, #tpu.memory_space<vmem>>, vector<1x1xf32>
    %29 = vector.shape_cast %27 : vector<8x1xf32> to vector<1x8x1xf32>
    %cst_10 = arith.constant dense<0.000000e+00> : vector<1xf32>
    %30 = vector.multi_reduction <add>, %29, %cst_10 [1, 2] : vector<1x8x1xf32> to vector<1xf32>
    %31 = vector.shape_cast %30 : vector<1xf32> to vector<1x1x1xf32>
    %32 = vector.extract %31[0, 0, 0] : f32 from vector<1x1x1xf32>
    %33 = vector.broadcast %32 : f32 to vector<1x1xf32>
    %34 = arith.addf %28, %33 : vector<1x1xf32>
    %c0_11 = arith.constant 0 : index
    %c0_12 = arith.constant 0 : index
    %35 = vector.load %arg5[%c0_11, %c0_12] : memref<1x1xf32, #tpu.memory_space<vmem>>, vector<1x1xf32>
    tpu.vector_store %arg5[%c0_11, %c0_12], %34 {strides = array<i32>} : memref<1x1xf32, #tpu.memory_space<vmem>>, vector<1x1xf32>,
    %c0_i32_13 = arith.constant 0 : i32
    %36 = arith.cmpi eq, %arg1, %c0_i32_13 : i32
    %37 = arith.extui %36 : i1 to i32
    %c0_i32_14 = arith.constant 0 : i32
    %38 = arith.cmpi ne, %37, %c0_i32_14 : i32
    scf.if %38 {
      %c0_15 = arith.constant 0 : index
      %c0_16 = arith.constant 0 : index
      %39 = vector.load %arg5[%c0_15, %c0_16] : memref<1x1xf32, #tpu.memory_space<vmem>>, vector<1x1xf32>
      %c0_17 = arith.constant 0 : index
      %c0_18 = arith.constant 0 : index
      %40 = vector.load %arg4[%c0_17, %c0_18] : memref<1x1xf32, #tpu.memory_space<vmem>>, vector<1x1xf32>
      tpu.vector_store %arg4[%c0_17, %c0_18], %39 {strides = array<i32>} : memref<1x1xf32, #tpu.memory_space<vmem>>, vector<1x1xf32>,
    } else {
    }
    return
  }
  func.func @transform_0(%arg0: i32, %arg1: i32) -> (i32, i32) {
    %c1_i32 = arith.constant 1 : i32
    %0 = arith.muli %arg0, %c1_i32 : i32
    %1 = arith.addi %0, %arg1 : i32
    %c0_i32 = arith.constant 0 : i32
    %c0_i32_0 = arith.constant 0 : i32
    return %1, %c0_i32 : i32, i32
  }
  func.func @transform_1(%arg0: i32, %arg1: i32) -> (i32, i32) {
    %c1_i32 = arith.constant 1 : i32
    %0 = arith.muli %arg0, %c1_i32 : i32
    %1 = arith.addi %0, %arg1 : i32
    %c0_i32 = arith.constant 0 : i32
    %c0_i32_0 = arith.constant 0 : i32
    return %1, %c0_i32 : i32, i32
  }
  func.func @transform_2(%arg0: i32, %arg1: i32) -> (i32, i32) {
    %c0_i32 = arith.constant 0 : i32
    %c0_i32_0 = arith.constant 0 : i32
    return %arg0, %c0_i32 : i32, i32
  }
}

</mosaic_0001>

<llo_original>
// kernel: tpu_custom_call.1
$region0: #{tpu_custom_call.1}
  #allocation0 [shape = 'u32[]', space=smem, size = 0x4, offset = 0x4, fixed_abs, tag = 'smem constant byte address 0x4 - core index']
  #allocation1 [shape = 'u32[144,128]{1,0:T(1,128)}', space=vmem, size = 0x12000, scoped, tag = 'internal scratch']
  #allocation2 [shape = 'f32[1,1]{1,0:T(1,128)}', space=vmem, size = 0x200, scoped, tag = 'scratch operand']
  %s0 = inlined_call_operand.hbm [shape: f32[8,256], index: 0, kind: input, shape index: {}]
  %s1 = inlined_call_operand.hbm [shape: f32[8,256], index: 1, kind: input, shape index: {}]
  %s2 = inlined_call_operand.hbm [shape: f32[1,1], index: 2, kind: output, shape index: {}]
  %s3 = sld [smem:[#allocation0]]
  $region34: #{tpu_custom_call.1} parent=0
    _
  %s5 = ssub.s32 1, %s3
  %s6 = scalar_select 0, %s5, %s3
  $region1: #{tpu_custom_call.1} parent=0
    #allocation3 [shape = 'u8[8192]{0}', space=vmem, size = 0x2000, scoped, tag = 'input window, operand 0, single buffered']
    #allocation4 [shape = 's32[1]{0}', space=sflag, size = 0x4, scoped, tag = 'scoped memory for tpu_custom_call.1']
    #allocation5 [shape = 's32[1]{0}', space=sflag, size = 0x4, scoped, tag = 'scoped memory for tpu_custom_call.1']
    #allocation6 [shape = 'u8[8192]{0}', space=vmem, size = 0x2000, scoped, tag = 'input window, operand 1, single buffered']
    #allocation7 [shape = 's32[1]{0}', space=sflag, size = 0x4, scoped, tag = 'scoped memory for tpu_custom_call.1']
    #allocation8 [shape = 'u8[512]{0}', space=vmem, size = 0x400, scoped, tag = 'output window, operand 0, single buffered']
    %7 = vsyncpa [#allocation4], 0
    %8 = vsyncpa [#allocation7], 0
    %9 = vsyncpa [#allocation5], 0
    // Predicated region
    $region2: #{tpu_custom_call.1} parent=1 // pred_check
      _
    $region3: #{tpu_custom_call.1} parent=1 // pred_check_branch
      %11 = sbr.rel (0) target = $region5
    $region4: #{tpu_custom_call.1} parent=1 // pred_region
      %s12 = sadd.s32 0, 0
      %s14 = ssub.s32 256, 256
      %15 = vsyncadd [#allocation4], %s14
      %s16 = smul.addr %s12, 2
      %s17 = smul.addr %s16, 128
      %s18 = scalar_lea.hbm %s0, %s17
      %s20 = sshll.u32 [#allocation3], 4
      %s21 = int_to_ptr.vmem [resolvable:$true] %s20
      %23 = dma.hbm_to_vmem [thread:$0]  %s18, 256, %s21, [#allocation4]
    $region5: #{tpu_custom_call.1} parent=1 // pred_fallthru
      _
    // Predicated region
    $region6: #{tpu_custom_call.1} parent=1 // pred_check
      _
    $region7: #{tpu_custom_call.1} parent=1 // pred_check_branch
      %25 = sbr.rel (0) target = $region9
    $region8: #{tpu_custom_call.1} parent=1 // pred_region
      %s26 = sadd.s32 0, 0
      %s28 = ssub.s32 256, 256
      %29 = vsyncadd [#allocation7], %s28
      %s30 = smul.addr %s26, 2
      %s31 = smul.addr %s30, 128
      %s32 = scalar_lea.hbm %s1, %s31
      %s34 = sshll.u32 [#allocation6], 4
      %s35 = int_to_ptr.vmem [resolvable:$true] %s34
      %37 = dma.hbm_to_vmem [thread:$0]  %s32, 256, %s35, [#allocation7]
    $region9: #{tpu_custom_call.1} parent=1 // pred_fallthru
      _
    // Predicated region
    $region10: #{tpu_custom_call.1} parent=1 // pred_check
      _
    $region11: #{tpu_custom_call.1} parent=1 // pred_check_branch
      %39 = sbr.rel (0) target = $region13
    $region12: #{tpu_custom_call.1} parent=1 // pred_region
      %40 = dma.done [#allocation4], 256
    $region13: #{tpu_custom_call.1} parent=1 // pred_fallthru
      _
    // Predicated region
    $region14: #{tpu_custom_call.1} parent=1 // pred_check
      _
    $region15: #{tpu_custom_call.1} parent=1 // pred_check_branch
      %42 = sbr.rel (0) target = $region17
    $region16: #{tpu_custom_call.1} parent=1 // pred_region
      %43 = dma.done [#allocation7], 256
    $region17: #{tpu_custom_call.1} parent=1 // pred_fallthru
      _
    %s44 = sadd.s32 0, 0
    %s45 = sadd.s32 0, 0
    %p46 = scmp.eq.s32.totalorder 0, 0
    // Predicated region
    $region18: #{tpu_custom_call.1} parent=1 // pred_check
      %p47 = pneg %p46
    $region19: #{tpu_custom_call.1} parent=1 // pred_check_branch
      %49 = sbr.rel (%p47) target = $region21
    $region20: #{tpu_custom_call.1} parent=1 // pred_region
      %vm50 = vcmask 0
      %51 = vst.msk [vmem:[#allocation2] sm:$0x1] %vm50, 0.0
    $region21: #{tpu_custom_call.1} parent=1 // pred_fallthru
      _
    %v52 = vld [vmem:[#allocation3] sm:$0xff]
    %v53 = vld [vmem:[#allocation3 + $0x8] sm:$0xff]
    %v54 = vld [vmem:[#allocation6] sm:$0xff]
    %v55 = vld [vmem:[#allocation6 + $0x8] sm:$0xff]
    %v56 = vmax.f32 %v52, %v53
    %57 = vmax.xlane.f32.xlu0 %v56
    %v58 = vpop.xlane.xlu0 %57
    %v59 = vsub.f32 %v52, %v58
    %v60 = vsub.f32 %v53, %v58
    %v61 = vmax.f32 %v54, %v55
    %62 = vmax.xlane.f32.xlu0 %v61
    %v63 = vpop.xlane.xlu0 %62
    %v64 = vsub.f32 %v54, %v63
    %v65 = vsub.f32 %v55, %v63
    %v66 = vmul.f32 %v59, 1.442695
    %v67 = vpow.pop %v66
    %v68 = vmul.f32 %v60, 1.442695
    %v69 = vpow.pop %v68
    %v70 = vadd.f32 %v67, %v69
    %71 = vadd.xlane.f32.xlu0 %v70
    %v72 = vpop.xlane.xlu0 %71
    %v73 = vmul.f32 %v64, 1.442695
    %v74 = vpow.pop %v73
    %v75 = vmul.f32 %v65, 1.442695
    %v76 = vpow.pop %v75
    %v77 = vadd.f32 %v74, %v76
    %78 = vadd.xlane.f32.xlu0 %v77
    %v79 = vpop.xlane.xlu0 %78
    %v80 = vsub.f32 %v59, %v64
    %v81 = vsub.f32 %v60, %v65
    %v82 = vmul.f32 %v67, %v80
    %v83 = vmul.f32 %v69, %v81
    %v84 = vadd.f32 %v82, %v83
    %85 = vadd.xlane.f32.xlu0 %v84
    %v86 = vpop.xlane.xlu0 %85
    %v87 = vrcp.pop %v72
    %v88 = vmul.f32 %v86, %v87
    %v89 = vlog2.pop %v79
    %v90 = vmul.f32 %v89, 0.6931472
    %v91 = vlog2.pop %v72
    %v92 = vmul.f32 %v91, 0.6931472
    %v93 = vsub.f32 %v90, %v92
    %v94 = vadd.f32 %v88, %v93
    %v95 = vld [vmem:[#allocation2] sm:$0x1]
    %vm96 = vcmask 7168
    %v97 = vsel %vm96, %v94, 0.0
    %98 = vadd.xlane.f32.xlu0 %v97
    %v99 = vpop.xlane.xlu0 %98
    %v100 = vrot.slane %v99, 4
    %v101 = vadd.f32 %v99, %v100
    %v102 = vrot.slane %v101, 2
    %v103 = vadd.f32 %v101, %v102
    %v104 = vrot.slane %v103, 1
    %v105 = vadd.f32 %v103, %v104
    %s106 = vtos %v105
    %v107 = vstv %s106
    %v108 = vadd.f32 %v95, %v107
    %vm109 = vcmask 0
    %110 = vst.msk [vmem:[#allocation2] sm:$0x1] %vm109, %v108
    // Predicated region
    $region22: #{tpu_custom_call.1} parent=1 // pred_check
      %p111 = pneg %p46
    $region23: #{tpu_custom_call.1} parent=1 // pred_check_branch
      %113 = sbr.rel (%p111) target = $region25
    $region24: #{tpu_custom_call.1} parent=1 // pred_region
      %v114 = vld [vmem:[#allocation2] sm:$0x1]
      %115 = vst.msk [vmem:[#allocation8] sm:$0x1] %vm109, %v114
    $region25: #{tpu_custom_call.1} parent=1 // pred_fallthru
      _
    // Predicated region
    $region26: #{tpu_custom_call.1} parent=1 // pred_check
      _
    $region27: #{tpu_custom_call.1} parent=1 // pred_check_branch
      %117 = sbr.rel (0) target = $region29
    $region28: #{tpu_custom_call.1} parent=1 // pred_region
      %s119 = ssub.s32 16, 16
      %120 = vsyncadd [#allocation5], %s119
      %s122 = sshll.u32 [#allocation8], 4
      %s123 = int_to_ptr.vmem [resolvable:$true] %s122
      %125 = dma.vmem_to_hbm [thread:$0]  %s123, 16, %s2, [#allocation5]
    $region29: #{tpu_custom_call.1} parent=1 // pred_fallthru
      _
    // Predicated region
    $region30: #{tpu_custom_call.1} parent=1 // pred_check
      _
    $region31: #{tpu_custom_call.1} parent=1 // pred_check_branch
      %127 = sbr.rel (0) target = $region33
    $region32: #{tpu_custom_call.1} parent=1 // pred_region
      %128 = dma.done [#allocation5], 16
    $region33: #{tpu_custom_call.1} parent=1 // pred_fallthru
      _
    %129 = vsyncpa [#allocation4], 1
    %130 = vsyncpa [#allocation7], 1
    %131 = vsyncpa [#allocation5], 1

</llo_original>
